<compile_context>
chip_gen: v7x
topology: tpu7x:2x2x1
jax: 0.10.0
libtpu: 0.0.40
codegen_flags: <defaults>
</compile_context>

<pallas_src>
import functools

import jax
import jax.numpy as jnp
from jax.experimental import pallas as pl
from jax.experimental.pallas import tpu as pltpu

_QUERY_BLOCK = 512  # rows of even-tokens per grid step (bounds VMEM on v7x)


# ----------------------------------------------------------------------------
# Kernel 1: ToMe bipartite matching scores (normalize + per-batch matmul +
#           row max / first-occurrence argmax)
# ----------------------------------------------------------------------------
def _tome_scores_kernel(a_ref, b_ref, max_ref, idx_ref, *, cm):
    # a_ref: [1, qblk, 2*cm]  (query-block rows: even|odd token concatenated
    #                          along lanes)
    # b_ref: [1, th,   2*cm]  (all rows of this batch, resident across qblks)
    ma = a_ref[0]                      # [qblk, 2*cm]
    mb = b_ref[0]                      # [th,   2*cm]
    a = ma[:, :cm]                     # even tokens of this query block
    b = mb[:, cm:]                     # all odd tokens of this batch
    # metric = metric / metric.norm(dim=-1, keepdim=True)  (rsqrt -> EUP)
    # NOTE: like torch, a zero-norm row yields non-finite scores (no epsilon).
    a = a * jax.lax.rsqrt(jnp.sum(a * a, axis=-1, keepdims=True))
    b = b * jax.lax.rsqrt(jnp.sum(b * b, axis=-1, keepdims=True))
    # scores = a @ b.T  — contract last dims, f32 operands on purpose (ranking
    # stability vs. the fp32 reference); accumulate in f32.
    scores = jax.lax.dot_general(
        a, b, dimension_numbers=(((1,), (1,)), ((), ())),
        preferred_element_type=jnp.float32)            # [qblk, th]
    # node_max, node_idx = scores.max(dim=-1)  (first-occurrence argmax)
    node_max = jnp.max(scores, axis=-1, keepdims=True)          # [qblk, 1]
    th = scores.shape[1]
    col = jax.lax.broadcasted_iota(jnp.int32, scores.shape, 1)
    node_idx = jnp.min(jnp.where(scores == node_max, col, th),
                       axis=-1, keepdims=True)                   # [qblk, 1]
    max_ref[...] = node_max[None]
    idx_ref[...] = node_idx[None].astype(jnp.int32)


def tome_scores(metric):
    """metric: [B, T, Cm]  ->  (node_max [B, T//2], node_idx [B, T//2])."""
    B, T, Cm = metric.shape
    th = T // 2
    # Free, contiguous reshape: row i holds [token 2i | token 2i+1] on lanes.
    m2 = metric.reshape(B, th, 2 * Cm)
    qblk = th if th <= _QUERY_BLOCK else _QUERY_BLOCK
    nq = pl.cdiv(th, qblk)
    kernel = functools.partial(_tome_scores_kernel, cm=Cm)
    node_max, node_idx = pl.pallas_call(
        kernel,
        out_shape=(jax.ShapeDtypeStruct((B, th, 1), jnp.float32),
                   jax.ShapeDtypeStruct((B, th, 1), jnp.int32)),
        grid=(B, nq),
        in_specs=[pl.BlockSpec((1, qblk, 2 * Cm), lambda b, q: (b, q, 0)),
                  pl.BlockSpec((1, th, 2 * Cm), lambda b, q: (b, 0, 0))],
        out_specs=(pl.BlockSpec((1, qblk, 1), lambda b, q: (b, q, 0)),
                   pl.BlockSpec((1, qblk, 1), lambda b, q: (b, q, 0))),
        compiler_params=pltpu.CompilerParams(
            dimension_semantics=("parallel", "parallel")),
        cost_estimate=pl.CostEstimate(
            flops=2 * B * th * th * Cm + 6 * B * T * Cm,
            transcendentals=B * T,
            bytes_accessed=8 * B * T * Cm + 8 * B * th),
    )(m2, m2)
    return node_max.reshape(B, th), node_idx.reshape(B, th)


# ----------------------------------------------------------------------------
# Kernel 2: projector MLP  (Linear -> GELU(exact/erf) -> Linear)
# ----------------------------------------------------------------------------
_SQRT2_INV = 0.7071067811865476


def _erf_poly(x):
    # Abramowitz & Stegun 7.1.26, |error| <= 1.5e-7 (guaranteed Mosaic
    # lowering: mul/add/div/abs/select/exp only).
    a1, a2, a3, a4, a5 = (0.254829592, -0.284496736, 1.421413741,
                          -1.453152027, 1.061405429)
    p = 0.3275911
    sgn = jnp.where(x < 0.0, -1.0, 1.0)
    ax = jnp.abs(x)
    t = 1.0 / (1.0 + p * ax)
    poly = ((((a5 * t + a4) * t + a3) * t + a2) * t + a1) * t
    return sgn * (1.0 - poly * jnp.exp(-ax * ax))


def _mlp_kernel(x_ref, w1_ref, b1_ref, w2_ref, b2_ref, o_ref):
    x = x_ref[...].astype(jnp.bfloat16)                         # [tm, C]
    h = jnp.dot(x, w1_ref[...], preferred_element_type=jnp.float32) + b1_ref[...]
    # exact (erf) GELU — matches torch.nn.GELU() default.
    h = 0.5 * h * (1.0 + _erf_poly(h * _SQRT2_INV))
    o = jnp.dot(h.astype(jnp.bfloat16), w2_ref[...],
                preferred_element_type=jnp.float32) + b2_ref[...]
    o_ref[...] = o.astype(o_ref.dtype)


def mlp_forward(x, w1, b1, w2, b2):
    B, T, C = x.shape
    H1 = w1.shape[1]
    H2 = w2.shape[1]
    M = B * T                       # flatten batch*tokens onto the MXU M dim
    x2 = x.reshape(M, C)
    w1b = w1.astype(jnp.bfloat16)   # bf16 operands, f32 accumulation
    w2b = w2.astype(jnp.bfloat16)
    tm = M if M <= 512 else 256     # M-tiling; weights stay resident
    nm = pl.cdiv(M, tm)
    out = pl.pallas_call(
        _mlp_kernel,
        out_shape=jax.ShapeDtypeStruct((M, H2), jnp.float32),
        grid=(nm,),
        in_specs=[pl.BlockSpec((tm, C), lambda i: (i, 0)),
                  pl.BlockSpec((C, H1), lambda i: (0, 0)),
                  pl.BlockSpec((1, H1), lambda i: (0, 0)),
                  pl.BlockSpec((H1, H2), lambda i: (0, 0)),
                  pl.BlockSpec((1, H2), lambda i: (0, 0))],
        out_specs=pl.BlockSpec((tm, H2), lambda i: (i, 0)),
        compiler_params=pltpu.CompilerParams(
            dimension_semantics=("parallel",)),
        cost_estimate=pl.CostEstimate(
            flops=2 * M * C * H1 + 2 * M * H1 * H2 + 30 * M * H1,
            transcendentals=M * H1,
            bytes_accessed=4 * (M * C + M * H2 + H1 + H2)
            + 2 * (C * H1 + H1 * H2)),
    )(x2, w1b, b1, w2b, b2)
    return out.reshape(B, T, H2)


# ----------------------------------------------------------------------------
# ToMe merge glue (argsort / gather / scatter_add) in plain JAX
# ----------------------------------------------------------------------------
# TODO(synk): argsort / take_along_axis / scatter_add have no Pallas TPU
# equivalent (no sort/scatter primitive); kept as XLA ops.
def bipartite_soft_matching(metric, r):
    """metric: [B, T, Cm]; returns merge(x) callable (mode is always 'sum')."""
    t = metric.shape[1]
    r = min(r, t // 2)
    assert r > 0, r

    node_max, node_idx = tome_scores(metric)          # Pallas kernel

    edge_idx = jnp.argsort(-node_max, axis=-1)        # descending
    unm_idx = edge_idx[:, r:]                         # [B, T//2 - r]
    src_idx = edge_idx[:, :r]                         # [B, r]
    dst_idx = jnp.take_along_axis(node_idx, src_idx, axis=1)  # [B, r]

    def merge(x):
        src, dst = x[:, ::2, :], x[:, 1::2, :]
        unm = jnp.take_along_axis(src, unm_idx[:, :, None], axis=1)
        srcg = jnp.take_along_axis(src, src_idx[:, :, None], axis=1)
        # dst.scatter_add(-2, dst_idx, src)
        dst = jax.vmap(lambda d, i, s: d.at[i].add(s))(dst, dst_idx, srcg)
        return jnp.concatenate([unm, dst], axis=1)

    return merge


def merge_wavg(merge, x, size=None):
    if size is None:
        size = jnp.ones_like(x[..., :1])
    # Fused: carry `size` as an extra channel so merge() runs once, not twice.
    xs = jnp.concatenate([x * size, size], axis=-1)
    xs = merge(xs)
    x, size = xs[..., :-1], xs[..., -1:]
    x = x / size
    return x, size


def merge_tokens(x, target_num_token, num_attention_heads):
    size = None
    b, p, c = x.shape
    tmp_p = p
    r_merge_list = []
    assert tmp_p > target_num_token, f"{tmp_p} should greater than {target_num_token}"
    while tmp_p != target_num_token:
        if tmp_p - target_num_token <= tmp_p // 2:
            r_merge_list.append(tmp_p - target_num_token)
            break
        else:
            r_merge_list.append(tmp_p // 2)
            tmp_p = tmp_p - tmp_p // 2

    head = num_attention_heads
    dim = c // head
    for r in r_merge_list:
        bb, pp, _ = x.shape
        metric = x.reshape(bb, pp, head, dim).mean(axis=2)
        merge = bipartite_soft_matching(metric, r)
        x, size = merge_wavg(merge, x, size)
    return x


# ----------------------------------------------------------------------------
# Module wrapper with deterministic synthetic parameters
# ----------------------------------------------------------------------------
class ToMe16MlpHd64:
    def __init__(self, mm_hidden_size, hidden_size, image_size, patch_size,
                 num_attention_heads, key):
        self.hw = image_size // patch_size
        self.num_attention_heads = num_attention_heads
        k1, k2, k3, k4 = jax.random.split(key, 4)
        s1 = 1.0 / (float(mm_hidden_size) ** 0.5)
        s2 = 1.0 / (float(hidden_size) ** 0.5)
        # weights stored as [in, out] (x @ W + b)
        self.w1 = jax.random.uniform(k1, (mm_hidden_size, hidden_size), jnp.float32, -s1, s1)
        self.b1 = jax.random.uniform(k2, (1, hidden_size), jnp.float32, -s1, s1)
        self.w2 = jax.random.uniform(k3, (hidden_size, hidden_size), jnp.float32, -s2, s2)
        self.b2 = jax.random.uniform(k4, (1, hidden_size), jnp.float32, -s2, s2)

    def forward(self, x, compress=False, local_num_frames=-1):
        height = width = self.hw
        assert height * width == x.shape[1]
        if local_num_frames != -1 and local_num_frames != 1:
            assert compress is True
        if compress:
            if local_num_frames != -1:
                num_frames = local_num_frames
                x = x.reshape(x.shape[0] // local_num_frames, -1, x.shape[-1])
            else:
                num_frames = x.shape[0]
                x = x.reshape(1, -1, x.shape[-1])
            num_tome_tokens = 16 * num_frames
        else:
            num_tome_tokens = 64
        x = merge_tokens(x, num_tome_tokens, self.num_attention_heads)
        x = mlp_forward(x, self.w1, self.b1, self.w2, self.b2)
        return x


if __name__ == "__main__":
    key = jax.random.PRNGKey(0)
    k_param, k_x = jax.random.split(key)

    # small config: image_size=24, patch_size=2 -> hw=12 -> 144 tokens
    # mm_hidden_size=128, hidden_size=128, heads=2 (head_dim 64 -> lane-dense
    # 2*Cm = 128 metric rows)
    B, IMG, PATCH, C, H, HEADS = 2, 24, 2, 128, 128, 2
    T = (IMG // PATCH) ** 2  # 144

    model = ToMe16MlpHd64(mm_hidden_size=C, hidden_size=H, image_size=IMG,
                          patch_size=PATCH, num_attention_heads=HEADS,
                          key=k_param)

    x = jax.random.normal(k_x, (B, T, C), dtype=jnp.float32)
    out = model.forward(x)  # compress=False -> 64 output tokens
    out = jax.block_until_ready(out)

    assert out.shape == (B, 64, H), out.shape
    assert bool(jnp.all(jnp.isfinite(out)))
    print("KERNEL_OK")
</pallas_src>

<mosaic_0001>
module attributes {stable_mosaic.version = 11 : i64} {
  func.func @_tome_scores_kernel(%arg0: i32, %arg1: i32, %arg2: memref<1x72x128xf32, #tpu.memory_space<vmem>>, %arg3: memref<1x72x128xf32, #tpu.memory_space<vmem>>, %arg4: memref<1x72x1xf32, #tpu.memory_space<vmem>>, %arg5: memref<1x72x1xi32, #tpu.memory_space<vmem>>) attributes {dimension_semantics = [#tpu.dimension_semantics<parallel>, #tpu.dimension_semantics<parallel>], iteration_bounds = array<i64: 2, 1>, scalar_prefetch = 0 : i64, scratch_operands = 0 : i64, tpu.core_type = #tpu.core_type<tc>, window_params = [{transform_indices = @transform_0, window_bounds = array<i64: 1, 72, 128>}, {transform_indices = @transform_1, window_bounds = array<i64: 1, 72, 128>}, {transform_indices = @transform_2, window_bounds = array<i64: 1, 72, 1>}, {transform_indices = @transform_3, window_bounds = array<i64: 1, 72, 1>}]} {
    %c0 = arith.constant 0 : index
    %c0_0 = arith.constant 0 : index
    %c0_1 = arith.constant 0 : index
    %0 = vector.load %arg2[%c0, %c0_0, %c0_1] : memref<1x72x128xf32, #tpu.memory_space<vmem>>, vector<1x72x128xf32>
    %1 = vector.shape_cast %0 : vector<1x72x128xf32> to vector<72x128xf32>
    %c0_2 = arith.constant 0 : index
    %c0_3 = arith.constant 0 : index
    %c0_4 = arith.constant 0 : index
    %2 = vector.load %arg3[%c0_2, %c0_3, %c0_4] : memref<1x72x128xf32, #tpu.memory_space<vmem>>, vector<1x72x128xf32>
    %3 = vector.shape_cast %2 : vector<1x72x128xf32> to vector<72x128xf32>
    %4 = vector.extract_strided_slice %1 {offsets = [0, 0], sizes = [72, 64], strides = [1, 1]} : vector<72x128xf32> to vector<72x64xf32>
    %5 = vector.extract_strided_slice %3 {offsets = [0, 64], sizes = [72, 64], strides = [1, 1]} : vector<72x128xf32> to vector<72x64xf32>
    %6 = arith.mulf %4, %4 : vector<72x64xf32>
    %cst = arith.constant dense<0.000000e+00> : vector<72xf32>
    %7 = vector.multi_reduction <add>, %6, %cst [1] : vector<72x64xf32> to vector<72xf32>
    %8 = vector.shape_cast %7 : vector<72xf32> to vector<72x1xf32>
    %9 = math.rsqrt %8 : vector<72x1xf32>
    %10 = vector.broadcast %9 : vector<72x1xf32> to vector<72x64xf32>
    %11 = arith.mulf %4, %10 : vector<72x64xf32>
    %12 = arith.mulf %5, %5 : vector<72x64xf32>
    %cst_5 = arith.constant dense<0.000000e+00> : vector<72xf32>
    %13 = vector.multi_reduction <add>, %12, %cst_5 [1] : vector<72x64xf32> to vector<72xf32>
    %14 = vector.shape_cast %13 : vector<72xf32> to vector<72x1xf32>
    %15 = math.rsqrt %14 : vector<72x1xf32>
    %16 = vector.broadcast %15 : vector<72x1xf32> to vector<72x64xf32>
    %17 = arith.mulf %5, %16 : vector<72x64xf32>
    %cst_6 = arith.constant dense<0.000000e+00> : vector<72x72xf32>
    %18 = tpu.matmul %11, %17, %cst_6 {dimension_numbers = #tpu.dot_dimension_numbers<[1], [1], [0], [0], [0, 0, 1, 0], [], []>} : vector<72x64xf32>, vector<72x64xf32>, vector<72x72xf32> -> vector<72x72xf32>
    %cst_7 = arith.constant dense<0xFF800000> : vector<72xf32>
    %19 = vector.multi_reduction <maximumf>, %18, %cst_7 [1] : vector<72x72xf32> to vector<72xf32>
    %20 = vector.shape_cast %19 : vector<72xf32> to vector<72x1xf32>
    %21 = tpu.iota {dimensions = array<i32: 1>} : vector<72x72xi32>
    %22 = vector.broadcast %20 : vector<72x1xf32> to vector<72x72xf32>
    %23 = arith.cmpf oeq, %18, %22 : vector<72x72xf32>
    %c72_i32 = arith.constant 72 : i32
    %24 = vector.broadcast %c72_i32 : i32 to vector<72x72xi32>
    %25 = arith.select %23, %21, %24 : vector<72x72xi1>, vector<72x72xi32>
    %cst_8 = arith.constant dense<2147483647> : vector<72xi32>
    %26 = vector.multi_reduction <minsi>, %25, %cst_8 [1] : vector<72x72xi32> to vector<72xi32>
    %27 = vector.shape_cast %26 : vector<72xi32> to vector<72x1xi32>
    %28 = vector.shape_cast %20 : vector<72x1xf32> to vector<1x72x1xf32>
    %c0_9 = arith.constant 0 : index
    %c0_10 = arith.constant 0 : index
    %c0_11 = arith.constant 0 : index
    %29 = vector.load %arg4[%c0_9, %c0_10, %c0_11] : memref<1x72x1xf32, #tpu.memory_space<vmem>>, vector<1x72x1xf32>
    tpu.vector_store %arg4[%c0_9, %c0_10, %c0_11], %28 {strides = array<i32>} : memref<1x72x1xf32, #tpu.memory_space<vmem>>, vector<1x72x1xf32>,
    %30 = vector.shape_cast %27 : vector<72x1xi32> to vector<1x72x1xi32>
    %c0_12 = arith.constant 0 : index
    %c0_13 = arith.constant 0 : index
    %c0_14 = arith.constant 0 : index
    %31 = vector.load %arg5[%c0_12, %c0_13, %c0_14] : memref<1x72x1xi32, #tpu.memory_space<vmem>>, vector<1x72x1xi32>
    tpu.vector_store %arg5[%c0_12, %c0_13, %c0_14], %30 {strides = array<i32>} : memref<1x72x1xi32, #tpu.memory_space<vmem>>, vector<1x72x1xi32>,
    return
  }
  func.func @transform_0(%arg0: i32, %arg1: i32) -> (i32, i32, i32) {
    %c0_i32 = arith.constant 0 : i32
    %c0_i32_0 = arith.constant 0 : i32
    return %arg0, %arg1, %c0_i32 : i32, i32, i32
  }
  func.func @transform_1(%arg0: i32, %arg1: i32) -> (i32, i32, i32) {
    %c0_i32 = arith.constant 0 : i32
    %c0_i32_0 = arith.constant 0 : i32
    %c0_i32_1 = arith.constant 0 : i32
    return %arg0, %c0_i32, %c0_i32_0 : i32, i32, i32
  }
  func.func @transform_2(%arg0: i32, %arg1: i32) -> (i32, i32, i32) {
    %c0_i32 = arith.constant 0 : i32
    %c0_i32_0 = arith.constant 0 : i32
    return %arg0, %arg1, %c0_i32 : i32, i32, i32
  }
  func.func @transform_3(%arg0: i32, %arg1: i32) -> (i32, i32, i32) {
    %c0_i32 = arith.constant 0 : i32
    %c0_i32_0 = arith.constant 0 : i32
    return %arg0, %arg1, %c0_i32 : i32, i32, i32
  }
}

</mosaic_0001>

<llo_original>
// kernel: tpu_custom_call.1
$region0: #{tpu_custom_call.1}
  #allocation0 [shape = 'u32[]', space=smem, size = 0x4, offset = 0x4, fixed_abs, tag = 'smem constant byte address 0x4 - core index']
  #allocation1 [shape = 'u32[144,128]{1,0:T(1,128)}', space=vmem, size = 0x12000, scoped, tag = 'internal scratch']
  %s0 = inlined_call_operand.hbm [shape: f32[2,72,128], index: 0, kind: input, shape index: {}]
  %s1 = inlined_call_operand.hbm [shape: f32[2,72,128], index: 1, kind: input, shape index: {}]
  %s2 = inlined_call_operand.vmem [shape: f32[2,72,1], index: 2, kind: output, shape index: {0}]
  %s3 = inlined_call_operand.vmem [shape: s32[2,72,1], index: 3, kind: output, shape index: {1}]
  %4 = xla_tuple %s2, %s3
  %s5 = sld [smem:[#allocation0]]
  $region57: #{tpu_custom_call.1} parent=0
    _
  %s7 = ssub.s32 1, %s5
  %s8 = scalar_select 0, %s7, %s5
  $region1: #{tpu_custom_call.1} parent=0
    #allocation2 [shape = 'u8[73728]{0}', space=vmem, size = 0x12000, scoped, tag = 'input window, operand 0']
    #allocation3 [shape = 's32[2]{0}', space=sflag, size = 0x8, scoped, tag = 'scoped memory for tpu_custom_call.1']
    #allocation4 [shape = 'u8[73728]{0}', space=vmem, size = 0x12000, scoped, tag = 'input window, operand 1']
    #allocation5 [shape = 's32[2]{0}', space=sflag, size = 0x8, scoped, tag = 'scoped memory for tpu_custom_call.1']
    %9 = vsyncpa [#allocation3], 0
    %s10 = scalar_lea.sflag [#allocation3], 1
    %11 = vsyncpa %s10, 0
    %12 = vsyncpa [#allocation5], 0
    %s13 = scalar_lea.sflag [#allocation5], 1
    %14 = vsyncpa %s13, 0
    loop: start=0, step=1, limit=4
    $region2: #{tpu_custom_call.1} parent=1 // loop_pre_header
      _
    $region3: #{tpu_custom_call.1} parent=1 // loop_header
      %s16 = sphi 0, %s20
      %p17 = scmp.ge.s32.totalorder %s16, 4
      %s23 = sphi 0, %s35
      %s24 = sphi 0, %s31
      %s25 = sphi 0, %s23
      %s26 = sphi 0, %s24
      %s27 = sphi 0, %s25
      %s28 = sphi 0, %s26
      %s40 = sphi 0, %s42
      %s43 = sphi 0, %s40
      %s44 = sphi 0, %s43
      %s60 = sphi 0, %s44
      %s66 = sphi 0, %s68
      %s69 = sphi 0, %s66
      %s70 = sphi 0, %s69
      %s86 = sphi 0, %s70
      %s94 = sphi 0, %s96
      %s97 = sphi 0, %s94
      %s98 = sphi 0, %s97
      %s114 = sphi 0, %s98
      %s122 = sphi 0, %s124
      %s125 = sphi 0, %s122
      %s126 = sphi 0, %s125
      %s142 = sphi 0, %s126
    $region4: #{tpu_custom_call.1} parent=1 // loop_header_branch
      %19 = sbr.rel (%p17) target = $region8
    $region5: #{tpu_custom_call.1} parent=1 // loop_body
      %s21 = ssub.s32 %s16, 1
      %s22 = ssub.s32 %s16, 2
      %s29 = sadd.s32 1, %s24
      %p30 = scmp.ge.s32.totalorder %s29, 1
      %s31 = scalar_select %p30, 0, %s29
      %s32 = sadd.s32 1, %s23
      %s33 = scalar_select %p30, %s32, %s23
      %p34 = scmp.ge.s32.totalorder %s33, 2
      %s35 = scalar_select %p34, 0, %s33
      %s36 = ssub.s32 %s23, %s35
      %s37 = ssub.s32 %s24, %s31
      %s38 = sor.u32 %s36, %s37
      %p39 = scmp.eq.s32.totalorder %s38, 0
      %s41 = sadd.s32 %s40, 1
      %s42 = scalar_select %p39, %s40, %s41
      %p45 = pneg %p39
      %p46 = scmp.eq.s32.totalorder %s16, 1
      %p47 = por %p45, %p46
      %p48 = scmp.ne.s32.totalorder %s40, %s43
      %p49 = scmp.eq.s32.totalorder %s16, 0
      %p50 = por %p48, %p49
      %p51 = scmp.ne.s32.totalorder %s40, %s43
      %p52 = scmp.eq.s32.totalorder %s21, 1
      %p53 = por %p51, %p52
      %p54 = scmp.ne.s32.totalorder %s43, %s44
      %p55 = scmp.eq.s32.totalorder %s21, 0
      %p56 = por %p54, %p55
      %p57 = scmp.ne.s32.totalorder %s43, %s44
      %p58 = scmp.eq.s32.totalorder %s22, 1
      %p59 = por %p57, %p58
      %p61 = scmp.ne.s32.totalorder %s44, %s60
      %p62 = scmp.eq.s32.totalorder %s22, 0
      %p63 = por %p61, %p62
      %s64 = ssub.s32 %s23, %s35
      %p65 = scmp.eq.s32.totalorder %s64, 0
      %s67 = sadd.s32 %s66, 1
      %s68 = scalar_select %p65, %s66, %s67
      %p71 = pneg %p65
      %p72 = scmp.eq.s32.totalorder %s16, 1
      %p73 = por %p71, %p72
      %p74 = scmp.ne.s32.totalorder %s66, %s69
      %p75 = scmp.eq.s32.totalorder %s16, 0
      %p76 = por %p74, %p75
      %p77 = scmp.ne.s32.totalorder %s66, %s69
      %p78 = scmp.eq.s32.totalorder %s21, 1
      %p79 = por %p77, %p78
      %p80 = scmp.ne.s32.totalorder %s69, %s70
      %p81 = scmp.eq.s32.totalorder %s21, 0
      %p82 = por %p80, %p81
      %p83 = scmp.ne.s32.totalorder %s69, %s70
      %p84 = scmp.eq.s32.totalorder %s22, 1
      %p85 = por %p83, %p84
      %p87 = scmp.ne.s32.totalorder %s70, %s86
      %p88 = scmp.eq.s32.totalorder %s22, 0
      %p89 = por %p87, %p88
      %s90 = ssub.s32 %s23, %s35
      %s91 = ssub.s32 %s24, %s31
      %s92 = sor.u32 %s90, %s91
      %p93 = scmp.eq.s32.totalorder %s92, 0
      %s95 = sadd.s32 %s94, 1
      %s96 = scalar_select %p93, %s94, %s95
      %p99 = pneg %p93
      %p100 = scmp.eq.s32.totalorder %s16, 1
      %p101 = por %p99, %p100
      %p102 = scmp.ne.s32.totalorder %s94, %s97
      %p103 = scmp.eq.s32.totalorder %s16, 0
      %p104 = por %p102, %p103
      %p105 = scmp.ne.s32.totalorder %s94, %s97
      %p106 = scmp.eq.s32.totalorder %s21, 1
      %p107 = por %p105, %p106
      %p108 = scmp.ne.s32.totalorder %s97, %s98
      %p109 = scmp.eq.s32.totalorder %s21, 0
      %p110 = por %p108, %p109
      %p111 = scmp.ne.s32.totalorder %s97, %s98
      %p112 = scmp.eq.s32.totalorder %s22, 1
      %p113 = por %p111, %p112
      %p115 = scmp.ne.s32.totalorder %s98, %s114
      %p116 = scmp.eq.s32.totalorder %s22, 0
      %p117 = por %p115, %p116
      %s118 = ssub.s32 %s23, %s35
      %s119 = ssub.s32 %s24, %s31
      %s120 = sor.u32 %s118, %s119
      %p121 = scmp.eq.s32.totalorder %s120, 0
      %s123 = sadd.s32 %s122, 1
      %s124 = scalar_select %p121, %s122, %s123
      %p127 = pneg %p121
      %p128 = scmp.eq.s32.totalorder %s16, 1
      %p129 = por %p127, %p128
      %p130 = scmp.ne.s32.totalorder %s122, %s125
      %p131 = scmp.eq.s32.totalorder %s16, 0
      %p132 = por %p130, %p131
      %p133 = scmp.ne.s32.totalorder %s122, %s125
      %p134 = scmp.eq.s32.totalorder %s21, 1
      %p135 = por %p133, %p134
      %p136 = scmp.ne.s32.totalorder %s125, %s126
      %p137 = scmp.eq.s32.totalorder %s21, 0
      %p138 = por %p136, %p137
      %p139 = scmp.ne.s32.totalorder %s125, %s126
      %p140 = scmp.eq.s32.totalorder %s22, 1
      %p141 = por %p139, %p140
      %p143 = scmp.ne.s32.totalorder %s126, %s142
      %p144 = scmp.eq.s32.totalorder %s22, 0
      %p145 = por %p143, %p144
      %p146 = scmp.le.s32.totalorder 1, %s16
      %p147 = scmp.lt.s32.totalorder %s16, 3
      %p148 = pnand %p146, %p147
      %p149 = pneg %p148
      // Predicated region
      $region9: #{tpu_custom_call.1} parent=5 // pred_check
        _
      $region10: #{tpu_custom_call.1} parent=5 // pred_check_branch
        %151 = sbr.rel (%p148) target = $region12
      $region11: #{tpu_custom_call.1} parent=5 // pred_region
        %s152 = ssub.s32 %s16, 1
      $region12: #{tpu_custom_call.1} parent=5 // pred_fallthru
        _
      %p153 = scmp.lt.s32.totalorder %s16, 2
      // Predicated region
      $region13: #{tpu_custom_call.1} parent=5 // pred_check
        %p154 = pneg %p153
      $region14: #{tpu_custom_call.1} parent=5 // pred_check_branch
        %156 = sbr.rel (%p154) target = $region16
      $region15: #{tpu_custom_call.1} parent=5 // pred_region
        // Predicated region
        $region17: #{tpu_custom_call.1} parent=15 // pred_check
          %p157 = pneg %p50
        $region18: #{tpu_custom_call.1} parent=15 // pred_check_branch
          %159 = sbr.rel (%p157) target = $region20
        $region19: #{tpu_custom_call.1} parent=15 // pred_region
          %s160 = sand.u32 %s40, 1
          %s161 = scalar_lea.sflag [#allocation3], %s160
          %s162 = sand.u32 %s40, 1
          %s163 = smul.addr %s162, 72
          %s164 = scalar_lea.vmem [#allocation2], %s163
          %s165 = smul.u32 9, %s24
          %s167 = ssub.s32 1152, 1152
          %168 = vsyncadd %s161, %s167
          %s169 = smul.addr %s23, 9
          %s170 = sadd.s32 %s165, %s169
          %s171 = smul.addr %s170, 128
          %s172 = scalar_lea.hbm %s0, %s171
          %s173 = sshll.u32 %s164, 4
          %s174 = int_to_ptr.vmem [resolvable:$true] %s173
          %179 = dma.hbm_to_vmem [thread:$0]  %s172, 1152, %s174, %s161, 128, 128, 8
        $region20: #{tpu_custom_call.1} parent=15 // pred_fallthru
          _
        // Predicated region
        $region21: #{tpu_custom_call.1} parent=15 // pred_check
          %p180 = pneg %p76
        $region22: #{tpu_custom_call.1} parent=15 // pred_check_branch
          %182 = sbr.rel (%p180) target = $region24
        $region23: #{tpu_custom_call.1} parent=15 // pred_region
          %s183 = sand.u32 %s66, 1
          %s184 = scalar_lea.sflag [#allocation5], %s183
          %s185 = sand.u32 %s66, 1
          %s186 = smul.addr %s185, 72
          %s187 = scalar_lea.vmem [#allocation4], %s186
          %s189 = ssub.s32 1152, 1152
          %190 = vsyncadd %s184, %s189
          %s191 = smul.addr %s23, 9
          %s192 = smul.addr %s191, 128
          %s193 = scalar_lea.hbm %s1, %s192
          %s194 = sshll.u32 %s187, 4
          %s195 = int_to_ptr.vmem [resolvable:$true] %s194
          %200 = dma.hbm_to_vmem [thread:$0]  %s193, 1152, %s195, %s184, 128, 128, 8
        $region24: #{tpu_custom_call.1} parent=15 // pred_fallthru
          _
      $region16: #{tpu_custom_call.1} parent=5 // pred_fallthru
        _
      %p201 = scmp.le.s32.totalorder 1, %s16
      %p202 = scmp.lt.s32.totalorder %s16, 3
      %p203 = pnand %p201, %p202
      %p204 = pneg %p203
      // Predicated region
      $region25: #{tpu_custom_call.1} parent=5 // pred_check
        _
      $region26: #{tpu_custom_call.1} parent=5 // pred_check_branch
        %206 = sbr.rel (%p203) target = $region28
      $region27: #{tpu_custom_call.1} parent=5 // pred_region
        %s207 = ssub.s32 %s16, 1
        %s208 = sand.u32 %s43, 1
        %s209 = scalar_lea.sflag [#allocation3], %s208
        %s210 = sand.u32 %s43, 1
        %s211 = smul.addr %s210, 72
        %s212 = scalar_lea.vmem [#allocation2], %s211
        // Predicated region
        $region29: #{tpu_custom_call.1} parent=27 // pred_check
          %p213 = pneg %p56
        $region30: #{tpu_custom_call.1} parent=27 // pred_check_branch
          %215 = sbr.rel (%p213) target = $region32
        $region31: #{tpu_custom_call.1} parent=27 // pred_region
          %216 = dma.done %s209, 1152
        $region32: #{tpu_custom_call.1} parent=27 // pred_fallthru
          _
        %s217 = sand.u32 %s69, 1
        %s218 = scalar_lea.sflag [#allocation5], %s217
        %s219 = sand.u32 %s69, 1
        %s220 = smul.addr %s219, 72
        %s221 = scalar_lea.vmem [#allocation4], %s220
        // Predicated region
        $region33: #{tpu_custom_call.1} parent=27 // pred_check
          %p222 = pneg %p82
        $region34: #{tpu_custom_call.1} parent=27 // pred_check_branch
          %224 = sbr.rel (%p222) target = $region36
        $region35: #{tpu_custom_call.1} parent=27 // pred_region
          %225 = dma.done %s218, 1152
        $region36: #{tpu_custom_call.1} parent=27 // pred_fallthru
          _
        %s226 = sand.u32 %s43, 1
        %s227 = scalar_lea.sflag [#allocation3], %s226
        %s228 = sand.u32 %s43, 1
        %s229 = smul.addr %s228, 72
        %s230 = scalar_lea.vmem [#allocation2], %s229
        %p231 = pneg %p56
        %p232 = pneg %p53
        %s233 = sand.u32 %s69, 1
        %s234 = scalar_lea.sflag [#allocation5], %s233
        %s235 = sand.u32 %s69, 1
        %s236 = smul.addr %s235, 72
        %s237 = scalar_lea.vmem [#allocation4], %s236
        %p238 = pneg %p82
        %p239 = pneg %p79
        %p240 = pneg %p110
        %p241 = pneg %p107
        %s242 = smul.u32 9, %s26
        %p243 = scmp.lt.s32.totalorder %s25, 1
        %s244 = scalar_select %p243, %s25, 1
        %p245 = scmp.lt.s32.totalorder %s242, 8
        %s246 = scalar_select %p245, %s242, 8
        %s247 = smul.addr %s244, 9
        %s248 = sadd.s32 %s246, %s247
        %s249 = smul.addr %s248, 8
        %s250 = scalar_lea.vmem %s2, %s249
        %p251 = pneg %p138
        %p252 = pneg %p135
        %s253 = smul.u32 9, %s26
        %p254 = scmp.lt.s32.totalorder %s25, 1
        %s255 = scalar_select %p254, %s25, 1
        %p256 = scmp.lt.s32.totalorder %s253, 8
        %s257 = scalar_select %p256, %s253, 8
        %s258 = smul.addr %s255, 9
        %s259 = sadd.s32 %s257, %s258
        %s260 = smul.addr %s259, 8
        %s261 = scalar_lea.vmem %s3, %s260
        %s262 = smul.u32 9, %s26
        %s263 = smul.u32 9, %s26
        %p264 = scmp.lt.s32.totalorder %s25, 1
        %s265 = scalar_select %p264, %s25, 1
        %p266 = scmp.lt.s32.totalorder %s263, 8
        %s267 = scalar_select %p266, %s263, 8
        %s268 = smul.addr %s265, 9
        %s269 = sadd.s32 %s267, %s268
        %s270 = smul.addr %s269, 8
        %s271 = scalar_lea.vmem %s2, %s270
        %s272 = smul.u32 9, %s26
        %s273 = smul.u32 9, %s26
        %p274 = scmp.lt.s32.totalorder %s25, 1
        %s275 = scalar_select %p274, %s25, 1
        %p276 = scmp.lt.s32.totalorder %s273, 8
        %s277 = scalar_select %p276, %s273, 8
        %s278 = smul.addr %s275, 9
        %s279 = sadd.s32 %s277, %s278
        %s280 = smul.addr %s279, 8
        %s281 = scalar_lea.vmem %s3, %s280
        %s282 = smul.u32 9, %s26
        %v283 = vld [vmem:[%s212] sm:$0xff]
        %v284 = vld [vmem:[%s212 + $0x8] sm:$0xff]
        %v285 = vld [vmem:[%s212 + $0x10] sm:$0xff]
        %v286 = vld [vmem:[%s212 + $0x18] sm:$0xff]
        %v287 = vld [vmem:[%s212 + $0x20] sm:$0xff]
        %v288 = vld [vmem:[%s212 + $0x28] sm:$0xff]
        %v289 = vld [vmem:[%s212 + $0x30] sm:$0xff]
        %v290 = vld [vmem:[%s212 + $0x38] sm:$0xff]
        %v291 = vld [vmem:[%s212 + $0x40] sm:$0xff]
        %v292 = vld [vmem:[%s221] sm:$0xff]
        %v293 = vld [vmem:[%s221 + $0x8] sm:$0xff]
        %v294 = vld [vmem:[%s221 + $0x10] sm:$0xff]
        %v295 = vld [vmem:[%s221 + $0x18] sm:$0xff]
        %v296 = vld [vmem:[%s221 + $0x20] sm:$0xff]
        %v297 = vld [vmem:[%s221 + $0x28] sm:$0xff]
        %v298 = vld [vmem:[%s221 + $0x30] sm:$0xff]
        %v299 = vld [vmem:[%s221 + $0x38] sm:$0xff]
        %v300 = vld [vmem:[%s221 + $0x40] sm:$0xff]
        %v301 = vmul.f32 %v283, %v283
        %v302 = vmul.f32 %v284, %v284
        %v303 = vmul.f32 %v285, %v285
        %v304 = vmul.f32 %v286, %v286
        %v305 = vmul.f32 %v287, %v287
        %v306 = vmul.f32 %v288, %v288
        %v307 = vmul.f32 %v289, %v289
        %v308 = vmul.f32 %v290, %v290
        %v309 = vmul.f32 %v291, %v291
        %vm310 = vcmask 523264
        %v311 = vsel %vm310, %v301, 0.0
        %312 = vadd.xlane.f32.xlu0 %v311
        %v313 = vpop.xlane.xlu0 %312
        %v314 = vsel %vm310, %v302, 0.0
        %315 = vadd.xlane.f32.xlu0 %v314
        %v316 = vpop.xlane.xlu0 %315
        %v317 = vsel %vm310, %v303, 0.0
        %318 = vadd.xlane.f32.xlu0 %v317
        %v319 = vpop.xlane.xlu0 %318
        %v320 = vsel %vm310, %v304, 0.0
        %321 = vadd.xlane.f32.xlu0 %v320
        %v322 = vpop.xlane.xlu0 %321
        %v323 = vsel %vm310, %v305, 0.0
        %324 = vadd.xlane.f32.xlu0 %v323
        %v325 = vpop.xlane.xlu0 %324
        %v326 = vsel %vm310, %v306, 0.0
        %327 = vadd.xlane.f32.xlu0 %v326
        %v328 = vpop.xlane.xlu0 %327
        %v329 = vsel %vm310, %v307, 0.0
        %330 = vadd.xlane.f32.xlu0 %v329
        %v331 = vpop.xlane.xlu0 %330
        %v332 = vsel %vm310, %v308, 0.0
        %333 = vadd.xlane.f32.xlu0 %v332
        %v334 = vpop.xlane.xlu0 %333
        %v335 = vsel %vm310, %v309, 0.0
        %336 = vadd.xlane.f32.xlu0 %v335
        %v337 = vpop.xlane.xlu0 %336
        %v338 = vrsqrt.pop %v313
        %v339 = vrsqrt.pop %v316
        %v340 = vrsqrt.pop %v319
        %v341 = vrsqrt.pop %v322
        %v342 = vrsqrt.pop %v325
        %v343 = vrsqrt.pop %v328
        %v344 = vrsqrt.pop %v331
        %v345 = vrsqrt.pop %v334
        %v346 = vrsqrt.pop %v337
        %v347 = vmul.f32 %v283, %v338
        %v348 = vmul.f32 %v284, %v339
        %v349 = vmul.f32 %v285, %v340
        %v350 = vmul.f32 %v286, %v341
        %v351 = vmul.f32 %v287, %v342
        %v352 = vmul.f32 %v288, %v343
        %v353 = vmul.f32 %v289, %v344
        %v354 = vmul.f32 %v290, %v345
        %v355 = vmul.f32 %v291, %v346
        %v356 = vmul.f32 %v292, %v292
        %v357 = vmul.f32 %v293, %v293
        %v358 = vmul.f32 %v294, %v294
        %v359 = vmul.f32 %v295, %v295
        %v360 = vmul.f32 %v296, %v296
        %v361 = vmul.f32 %v297, %v297
        %v362 = vmul.f32 %v298, %v298
        %v363 = vmul.f32 %v299, %v299
        %v364 = vmul.f32 %v300, %v300
        %374 = vrot.lane.b32.xlu0 %v356, 64
        %v375 = vpop.permute.xlu0 %374
        %376 = vrot.lane.b32.xlu0 %v357, 64
        %v377 = vpop.permute.xlu0 %376
        %378 = vrot.lane.b32.xlu0 %v358, 64
        %v379 = vpop.permute.xlu0 %378
        %380 = vrot.lane.b32.xlu0 %v359, 64
        %v381 = vpop.permute.xlu0 %380
        %382 = vrot.lane.b32.xlu0 %v360, 64
        %v383 = vpop.permute.xlu0 %382
        %384 = vrot.lane.b32.xlu0 %v361, 64
        %v385 = vpop.permute.xlu0 %384
        %386 = vrot.lane.b32.xlu0 %v362, 64
        %v387 = vpop.permute.xlu0 %386
        %388 = vrot.lane.b32.xlu0 %v363, 64
        %v389 = vpop.permute.xlu0 %388
        %390 = vrot.lane.b32.xlu0 %v364, 64
        %v391 = vpop.permute.xlu0 %390
        %v401 = vsel %vm310, %v375, 0.0
        %402 = vadd.xlane.f32.xlu0 %v401
        %v403 = vpop.xlane.xlu0 %402
        %v404 = vsel %vm310, %v377, 0.0
        %405 = vadd.xlane.f32.xlu0 %v404
        %v406 = vpop.xlane.xlu0 %405
        %v407 = vsel %vm310, %v379, 0.0
        %408 = vadd.xlane.f32.xlu0 %v407
        %v409 = vpop.xlane.xlu0 %408
        %v410 = vsel %vm310, %v381, 0.0
        %411 = vadd.xlane.f32.xlu0 %v410
        %v412 = vpop.xlane.xlu0 %411
        %v413 = vsel %vm310, %v383, 0.0
        %414 = vadd.xlane.f32.xlu0 %v413
        %v415 = vpop.xlane.xlu0 %414
        %v416 = vsel %vm310, %v385, 0.0
        %417 = vadd.xlane.f32.xlu0 %v416
        %v418 = vpop.xlane.xlu0 %417
        %v419 = vsel %vm310, %v387, 0.0
        %420 = vadd.xlane.f32.xlu0 %v419
        %v421 = vpop.xlane.xlu0 %420
        %v422 = vsel %vm310, %v389, 0.0
        %423 = vadd.xlane.f32.xlu0 %v422
        %v424 = vpop.xlane.xlu0 %423
        %v425 = vsel %vm310, %v391, 0.0
        %426 = vadd.xlane.f32.xlu0 %v425
        %v427 = vpop.xlane.xlu0 %426
        %v428 = vrsqrt.pop %v403
        %v429 = vrsqrt.pop %v406
        %v430 = vrsqrt.pop %v409
        %v431 = vrsqrt.pop %v412
        %v432 = vrsqrt.pop %v415
        %v433 = vrsqrt.pop %v418
        %v434 = vrsqrt.pop %v421
        %v435 = vrsqrt.pop %v424
        %v436 = vrsqrt.pop %v427
        %v437 = vmul.f32 %v292, %v428
        %v438 = vmul.f32 %v293, %v429
        %v439 = vmul.f32 %v294, %v430
        %v440 = vmul.f32 %v295, %v431
        %v441 = vmul.f32 %v296, %v432
        %v442 = vmul.f32 %v297, %v433
        %v443 = vmul.f32 %v298, %v434
        %v444 = vmul.f32 %v299, %v435
        %v445 = vmul.f32 %v300, %v436
        %455 = vrot.lane.b32.xlu0 %v437, 64
        %v456 = vpop.permute.xlu0 %455
        %457 = vrot.lane.b32.xlu0 %v438, 64
        %v458 = vpop.permute.xlu0 %457
        %459 = vrot.lane.b32.xlu0 %v439, 64
        %v460 = vpop.permute.xlu0 %459
        %461 = vrot.lane.b32.xlu0 %v440, 64
        %v462 = vpop.permute.xlu0 %461
        %463 = vrot.lane.b32.xlu0 %v441, 64
        %v464 = vpop.permute.xlu0 %463
        %465 = vrot.lane.b32.xlu0 %v442, 64
        %v466 = vpop.permute.xlu0 %465
        %467 = vrot.lane.b32.xlu0 %v443, 64
        %v468 = vpop.permute.xlu0 %467
        %469 = vrot.lane.b32.xlu0 %v444, 64
        %v470 = vpop.permute.xlu0 %469
        %471 = vrot.lane.b32.xlu0 %v445, 64
        %v472 = vpop.permute.xlu0 %471
        %v474 = vsel %vm310, %v347, 0
        %v477 = vsel %vm310, %v348, 0
        %v480 = vsel %vm310, %v349, 0
        %v483 = vsel %vm310, %v350, 0
        %v486 = vsel %vm310, %v351, 0
        %v489 = vsel %vm310, %v352, 0
        %v492 = vsel %vm310, %v353, 0
        %v495 = vsel %vm310, %v354, 0
        %v498 = vsel %vm310, %v355, 0
        %v500 = vsel %vm310, %v456, 0
        %v502 = vsel %vm310, %v458, 0
        %v504 = vsel %vm310, %v460, 0
        %v506 = vsel %vm310, %v462, 0
        %v508 = vsel %vm310, %v464, 0
        %v510 = vsel %vm310, %v466, 0
        %v512 = vsel %vm310, %v468, 0
        %v514 = vsel %vm310, %v470, 0
        %v516 = vsel %vm310, %v472, 0
        %518 = vmatprep.subr.mxu0 0.0
        %519 = vmatpush1.xpose.msra.mxu0 %v500
        %520 = vmatprep.subr.mxu0 0.0
        %521 = vmatpush1.xpose.msra.mxu0 %v502
        %522 = vmatprep.subr.mxu0 0.0
        %523 = vmatpush1.xpose.msra.mxu0 %v504
        %524 = vmatprep.subr.mxu0 0.0
        %525 = vmatpush1.xpose.msra.mxu0 %v506
        %526 = vmatprep.subr.mxu0 0.0
        %527 = vmatpush1.xpose.msra.mxu0 %v508
        %528 = vmatprep.subr.mxu0 0.0
        %529 = vmatpush1.xpose.msra.mxu0 %v510
        %530 = vmatprep.subr.mxu0 0.0
        %531 = vmatpush1.xpose.msra.mxu0 %v512
        %532 = vmatprep.subr.mxu0 0.0
        %533 = vmatpush1.xpose.msra.mxu0 %v514
        %534 = vmatprep.subr.mxu0 0.0
        %535 = vmatpush1.xpose.msra.mxu0 %v516
        %536 = vmatprep.subr.mxu0 0.0
        %537 = vmatpush1.xpose.msra.mxu0 0.0
        %538 = vmatprep.subr.mxu0 0.0
        %539 = vmatpush1.xpose.msra.mxu0 0.0
        %540 = vmatprep.subr.mxu0 0.0
        %541 = vmatpush1.xpose.msra.mxu0 0.0
        %542 = vmatprep.subr.mxu0 0.0
        %543 = vmatpush1.xpose.msra.mxu0 0.0
        %544 = vmatprep.subr.mxu0 0.0
        %545 = vmatpush1.xpose.msra.mxu0 0.0
        %546 = vmatprep.subr.mxu0 0.0
        %547 = vmatpush1.xpose.msra.mxu0 0.0
        %548 = vmatprep.subr.mxu0 0.0
        %549 = vmatpush1.xpose.msra.mxu0 0.0
        %550 = vmatprep.subr.mxu0 0.0
        %551 = vmatpush1.xpose.msra.mxu0 0.0
        %552 = vmatprep.subr.mxu0 0.0
        %553 = vmatpush1.xpose.msra.mxu0 0.0
        %554 = vmatprep.subr.mxu0 0.0
        %555 = vmatpush1.xpose.msra.mxu0 0.0
        %556 = vmatprep.subr.mxu0 0.0
        %557 = vmatpush1.xpose.msra.mxu0 0.0
        %558 = vmatprep.subr.mxu0 0.0
        %559 = vmatpush1.xpose.msra.mxu0 0.0
        %560 = vmatprep.subr.mxu0 0.0
        %561 = vmatpush1.xpose.msra.mxu0 0.0
        %562 = vmatprep.subr.mxu0 0.0
        %563 = vmatpush1.xpose.msra.mxu0 0.0
        %564 = vmatprep.subr.mxu0 0.0
        %565 = vmatpush1.xpose.msra.mxu0 0.0
        %566 = vmatprep.subr.mxu0 0.0
        %567 = vmatpush1.xpose.msra.mxu0 0.0
        %568 = vmatprep.subr.mxu0 0.0
        %569 = vmatpush1.xpose.msra.mxu0 0.0
        %570 = vmatprep.subr.mxu0 0.0
        %571 = vmatpush1.xpose.msra.mxu0 0.0
        %572 = vmatprep.subr.mxu0 0.0
        %573 = vmatpush1.xpose.msra.mxu0 0.0
        %574 = vmatprep.subr.mxu0 0.0
        %575 = vmatpush1.xpose.msra.mxu0 0.0
        %576 = vmatprep.subr.mxu0 0.0
        %577 = vmatpush1.xpose.msra.mxu0 0.0
        %578 = vmatprep.subr.mxu0 0.0
        %579 = vmatpush1.xpose.msra.mxu0 0.0
        %580 = vmatprep.subr.mxu0 0.0
        %581 = vmatpush1.xpose.msra.mxu0 0.0
        %582 = vmatprep.mubr.f32.mxu0 0.0
        %583 = vmatmul.mubr.f32.gmra.mrb[0].mxu0 %v474
        %v584 = vpop.f32.mrb[0].mxu0
        %v585 = vadd.f32 0.0, %v584
        %v586 = vpop.f32.mrb[0].mxu0
        %587 = vmatprep.mubr.f32.mxu0 0.0
        %588 = vmatmul.mubr.f32.gmra.mrb[0].mxu0 %v477
        %v589 = vpop.f32.mrb[0].mxu0
        %v590 = vadd.f32 0.0, %v589
        %v591 = vpop.f32.mrb[0].mxu0
        %592 = vmatprep.mubr.f32.mxu0 0.0
        %593 = vmatmul.mubr.f32.gmra.mrb[0].mxu0 %v480
        %v594 = vpop.f32.mrb[0].mxu0
        %v595 = vadd.f32 0.0, %v594
        %v596 = vpop.f32.mrb[0].mxu0
        %597 = vmatprep.mubr.f32.mxu0 0.0
        %598 = vmatmul.mubr.f32.gmra.mrb[0].mxu0 %v483
        %v599 = vpop.f32.mrb[0].mxu0
        %v600 = vadd.f32 0.0, %v599
        %v601 = vpop.f32.mrb[0].mxu0
        %602 = vmatprep.mubr.f32.mxu0 0.0
        %603 = vmatmul.mubr.f32.gmra.mrb[0].mxu0 %v486
        %v604 = vpop.f32.mrb[0].mxu0
        %v605 = vadd.f32 0.0, %v604
        %v606 = vpop.f32.mrb[0].mxu0
        %607 = vmatprep.mubr.f32.mxu0 0.0
        %608 = vmatmul.mubr.f32.gmra.mrb[0].mxu0 %v489
        %v609 = vpop.f32.mrb[0].mxu0
        %v610 = vadd.f32 0.0, %v609
        %v611 = vpop.f32.mrb[0].mxu0
        %612 = vmatprep.mubr.f32.mxu0 0.0
        %613 = vmatmul.mubr.f32.gmra.mrb[0].mxu0 %v492
        %v614 = vpop.f32.mrb[0].mxu0
        %v615 = vadd.f32 0.0, %v614
        %v616 = vpop.f32.mrb[0].mxu0
        %617 = vmatprep.mubr.f32.mxu0 0.0
        %618 = vmatmul.mubr.f32.gmra.mrb[0].mxu0 %v495
        %v619 = vpop.f32.mrb[0].mxu0
        %v620 = vadd.f32 0.0, %v619
        %v621 = vpop.f32.mrb[0].mxu0
        %622 = vmatprep.mubr.f32.mxu0 0.0
        %623 = vmatmul.mubr.f32.gmra.mrb[0].mxu0 %v498
        %v624 = vpop.f32.mrb[0].mxu0
        %v625 = vadd.f32 0.0, %v624
        %v626 = vpop.f32.mrb[0].mxu0
        %627 = vdwg.mxu0
        %vm628 = vcmask 588800
        %v629 = vsel %vm628, %v585, -inf
        %630 = vmax.xlane.f32.xlu0 %v629
        %v631 = vpop.xlane.xlu0 %630
        %v632 = vsel %vm628, %v590, -inf
        %633 = vmax.xlane.f32.xlu0 %v632
        %v634 = vpop.xlane.xlu0 %633
        %v635 = vsel %vm628, %v595, -inf
        %636 = vmax.xlane.f32.xlu0 %v635
        %v637 = vpop.xlane.xlu0 %636
        %v638 = vsel %vm628, %v600, -inf
        %639 = vmax.xlane.f32.xlu0 %v638
        %v640 = vpop.xlane.xlu0 %639
        %v641 = vsel %vm628, %v605, -inf
        %642 = vmax.xlane.f32.xlu0 %v641
        %v643 = vpop.xlane.xlu0 %642
        %v644 = vsel %vm628, %v610, -inf
        %645 = vmax.xlane.f32.xlu0 %v644
        %v646 = vpop.xlane.xlu0 %645
        %v647 = vsel %vm628, %v615, -inf
        %648 = vmax.xlane.f32.xlu0 %v647
        %v649 = vpop.xlane.xlu0 %648
        %v650 = vsel %vm628, %v620, -inf
        %651 = vmax.xlane.f32.xlu0 %v650
        %v652 = vpop.xlane.xlu0 %651
        %v653 = vsel %vm628, %v625, -inf
        %654 = vmax.xlane.f32.xlu0 %v653
        %v655 = vpop.xlane.xlu0 %654
        %v656 = vlaneseq
        %v657 = vand.u32 %v656, 127
        %vm658 = vcmp.eq.f32.partialorder %v585, %v631
        %vm659 = vcmp.eq.f32.partialorder %v590, %v634
        %vm660 = vcmp.eq.f32.partialorder %v595, %v637
        %vm661 = vcmp.eq.f32.partialorder %v600, %v640
        %vm662 = vcmp.eq.f32.partialorder %v605, %v643
        %vm663 = vcmp.eq.f32.partialorder %v610, %v646
        %vm664 = vcmp.eq.f32.partialorder %v615, %v649
        %vm665 = vcmp.eq.f32.partialorder %v620, %v652
        %vm666 = vcmp.eq.f32.partialorder %v625, %v655
        %v667 = vsel %vm658, %v657, 72
        %v668 = vsel %vm659, %v657, 72
        %v669 = vsel %vm660, %v657, 72
        %v670 = vsel %vm661, %v657, 72
        %v671 = vsel %vm662, %v657, 72
        %v672 = vsel %vm663, %v657, 72
        %v673 = vsel %vm664, %v657, 72
        %v674 = vsel %vm665, %v657, 72
        %v675 = vsel %vm666, %v657, 72
        %v676 = vsel %vm628, %v667, 2147483647
        %v677 = vand.u32 %v676, 65535
        %v678 = vshra.s32 %v676, 16
        %v679 = vcvt.s32.f32 %v677
        %v680 = vcvt.s32.f32 %v678
        %681 = vmin.xlane.f32.xlu0 %v680
        %v682 = vpop.xlane.xlu0 %681
        %vm683 = vcmp.eq.f32.partialorder %v680, %v682
        %v684 = vsel %vm683, %v679, inf
        %685 = vmin.xlane.f32.xlu0 %v684
        %v686 = vpop.xlane.xlu0 %685
        %v687 = vcvt.f32.s32 %v686
        %v688 = vcvt.f32.s32 %v682
        %v689 = vshll.u32 %v688, 16
        %v690 = vadd.s32 %v689, %v687
        %v691 = vsel %vm628, %v668, 2147483647
        %v692 = vand.u32 %v691, 65535
        %v693 = vshra.s32 %v691, 16
        %v694 = vcvt.s32.f32 %v692
        %v695 = vcvt.s32.f32 %v693
        %696 = vmin.xlane.f32.xlu0 %v695
        %v697 = vpop.xlane.xlu0 %696
        %vm698 = vcmp.eq.f32.partialorder %v695, %v697
        %v699 = vsel %vm698, %v694, inf
        %700 = vmin.xlane.f32.xlu0 %v699
        %v701 = vpop.xlane.xlu0 %700
        %v702 = vcvt.f32.s32 %v701
        %v703 = vcvt.f32.s32 %v697
        %v704 = vshll.u32 %v703, 16
        %v705 = vadd.s32 %v704, %v702
        %v706 = vsel %vm628, %v669, 2147483647
        %v707 = vand.u32 %v706, 65535
        %v708 = vshra.s32 %v706, 16
        %v709 = vcvt.s32.f32 %v707
        %v710 = vcvt.s32.f32 %v708
        %711 = vmin.xlane.f32.xlu0 %v710
        %v712 = vpop.xlane.xlu0 %711
        %vm713 = vcmp.eq.f32.partialorder %v710, %v712
        %v714 = vsel %vm713, %v709, inf
        %715 = vmin.xlane.f32.xlu0 %v714
        %v716 = vpop.xlane.xlu0 %715
        %v717 = vcvt.f32.s32 %v716
        %v718 = vcvt.f32.s32 %v712
        %v719 = vshll.u32 %v718, 16
        %v720 = vadd.s32 %v719, %v717
        %v721 = vsel %vm628, %v670, 2147483647
        %v722 = vand.u32 %v721, 65535
        %v723 = vshra.s32 %v721, 16
        %v724 = vcvt.s32.f32 %v722
        %v725 = vcvt.s32.f32 %v723
        %726 = vmin.xlane.f32.xlu0 %v725
        %v727 = vpop.xlane.xlu0 %726
        %vm728 = vcmp.eq.f32.partialorder %v725, %v727
        %v729 = vsel %vm728, %v724, inf
        %730 = vmin.xlane.f32.xlu0 %v729
        %v731 = vpop.xlane.xlu0 %730
        %v732 = vcvt.f32.s32 %v731
        %v733 = vcvt.f32.s32 %v727
        %v734 = vshll.u32 %v733, 16
        %v735 = vadd.s32 %v734, %v732
        %v736 = vsel %vm628, %v671, 2147483647
        %v737 = vand.u32 %v736, 65535
        %v738 = vshra.s32 %v736, 16
        %v739 = vcvt.s32.f32 %v737
        %v740 = vcvt.s32.f32 %v738
        %741 = vmin.xlane.f32.xlu0 %v740
        %v742 = vpop.xlane.xlu0 %741
        %vm743 = vcmp.eq.f32.partialorder %v740, %v742
        %v744 = vsel %vm743, %v739, inf
        %745 = vmin.xlane.f32.xlu0 %v744
        %v746 = vpop.xlane.xlu0 %745
        %v747 = vcvt.f32.s32 %v746
        %v748 = vcvt.f32.s32 %v742
        %v749 = vshll.u32 %v748, 16
        %v750 = vadd.s32 %v749, %v747
        %v751 = vsel %vm628, %v672, 2147483647
        %v752 = vand.u32 %v751, 65535
        %v753 = vshra.s32 %v751, 16
        %v754 = vcvt.s32.f32 %v752
        %v755 = vcvt.s32.f32 %v753
        %756 = vmin.xlane.f32.xlu0 %v755
        %v757 = vpop.xlane.xlu0 %756
        %vm758 = vcmp.eq.f32.partialorder %v755, %v757
        %v759 = vsel %vm758, %v754, inf
        %760 = vmin.xlane.f32.xlu0 %v759
        %v761 = vpop.xlane.xlu0 %760
        %v762 = vcvt.f32.s32 %v761
        %v763 = vcvt.f32.s32 %v757
        %v764 = vshll.u32 %v763, 16
        %v765 = vadd.s32 %v764, %v762
        %v766 = vsel %vm628, %v673, 2147483647
        %v767 = vand.u32 %v766, 65535
        %v768 = vshra.s32 %v766, 16
        %v769 = vcvt.s32.f32 %v767
        %v770 = vcvt.s32.f32 %v768
        %771 = vmin.xlane.f32.xlu0 %v770
        %v772 = vpop.xlane.xlu0 %771
        %vm773 = vcmp.eq.f32.partialorder %v770, %v772
        %v774 = vsel %vm773, %v769, inf
        %775 = vmin.xlane.f32.xlu0 %v774
        %v776 = vpop.xlane.xlu0 %775
        %v777 = vcvt.f32.s32 %v776
        %v778 = vcvt.f32.s32 %v772
        %v779 = vshll.u32 %v778, 16
        %v780 = vadd.s32 %v779, %v777
        %v781 = vsel %vm628, %v674, 2147483647
        %v782 = vand.u32 %v781, 65535
        %v783 = vshra.s32 %v781, 16
        %v784 = vcvt.s32.f32 %v782
        %v785 = vcvt.s32.f32 %v783
        %786 = vmin.xlane.f32.xlu0 %v785
        %v787 = vpop.xlane.xlu0 %786
        %vm788 = vcmp.eq.f32.partialorder %v785, %v787
        %v789 = vsel %vm788, %v784, inf
        %790 = vmin.xlane.f32.xlu0 %v789
        %v791 = vpop.xlane.xlu0 %790
        %v792 = vcvt.f32.s32 %v791
        %v793 = vcvt.f32.s32 %v787
        %v794 = vshll.u32 %v793, 16
        %v795 = vadd.s32 %v794, %v792
        %v796 = vsel %vm628, %v675, 2147483647
        %v797 = vand.u32 %v796, 65535
        %v798 = vshra.s32 %v796, 16
        %v799 = vcvt.s32.f32 %v797
        %v800 = vcvt.s32.f32 %v798
        %801 = vmin.xlane.f32.xlu0 %v800
        %v802 = vpop.xlane.xlu0 %801
        %vm803 = vcmp.eq.f32.partialorder %v800, %v802
        %v804 = vsel %vm803, %v799, inf
        %805 = vmin.xlane.f32.xlu0 %v804
        %v806 = vpop.xlane.xlu0 %805
        %v807 = vcvt.f32.s32 %v806
        %v808 = vcvt.f32.s32 %v802
        %v809 = vshll.u32 %v808, 16
        %v810 = vadd.s32 %v809, %v807
        %vm811 = vcmask 7168
        %812 = vst.msk [vmem:[%s271] sm:$0xff] %vm811, %v631
        %813 = vst.msk [vmem:[%s271 + $0x8] sm:$0xff] %vm811, %v634
        %814 = vst.msk [vmem:[%s271 + $0x10] sm:$0xff] %vm811, %v637
        %815 = vst.msk [vmem:[%s271 + $0x18] sm:$0xff] %vm811, %v640
        %816 = vst.msk [vmem:[%s271 + $0x20] sm:$0xff] %vm811, %v643
        %817 = vst.msk [vmem:[%s271 + $0x28] sm:$0xff] %vm811, %v646
        %818 = vst.msk [vmem:[%s271 + $0x30] sm:$0xff] %vm811, %v649
        %819 = vst.msk [vmem:[%s271 + $0x38] sm:$0xff] %vm811, %v652
        %820 = vst.msk [vmem:[%s271 + $0x40] sm:$0xff] %vm811, %v655
        %821 = vst.msk [vmem:[%s281] sm:$0xff] %vm811, %v690
        %822 = vst.msk [vmem:[%s281 + $0x8] sm:$0xff] %vm811, %v705
        %823 = vst.msk [vmem:[%s281 + $0x10] sm:$0xff] %vm811, %v720
        %824 = vst.msk [vmem:[%s281 + $0x18] sm:$0xff] %vm811, %v735
        %825 = vst.msk [vmem:[%s281 + $0x20] sm:$0xff] %vm811, %v750
        %826 = vst.msk [vmem:[%s281 + $0x28] sm:$0xff] %vm811, %v765
        %827 = vst.msk [vmem:[%s281 + $0x30] sm:$0xff] %vm811, %v780
        %828 = vst.msk [vmem:[%s281 + $0x38] sm:$0xff] %vm811, %v795
        %829 = vst.msk [vmem:[%s281 + $0x40] sm:$0xff] %vm811, %v810
        %s830 = smul.u32 9, %s26
        %p831 = scmp.lt.s32.totalorder %s25, 1
        %s832 = scalar_select %p831, %s25, 1
        %p833 = scmp.lt.s32.totalorder %s830, 8
        %s834 = scalar_select %p833, %s830, 8
        %s835 = smul.addr %s832, 9
        %s836 = sadd.s32 %s834, %s835
        %s837 = smul.addr %s836, 8
        %s838 = scalar_lea.vmem %s2, %s837
        %s839 = smul.u32 9, %s26
        %p840 = scmp.lt.s32.totalorder %s25, 1
        %s841 = scalar_select %p840, %s25, 1
        %p842 = scmp.lt.s32.totalorder %s839, 8
        %s843 = scalar_select %p842, %s839, 8
        %s844 = smul.addr %s841, 9
        %s845 = sadd.s32 %s843, %s844
        %s846 = smul.addr %s845, 8
        %s847 = scalar_lea.vmem %s3, %s846
        // Predicated region
        $region37: #{tpu_custom_call.1} parent=27 // pred_check
          %p848 = pneg %p107
        $region38: #{tpu_custom_call.1} parent=27 // pred_check_branch
          %850 = sbr.rel (%p848) target = $region40
        $region39: #{tpu_custom_call.1} parent=27 // pred_region
          %s851 = smul.u32 9, %s26
        $region40: #{tpu_custom_call.1} parent=27 // pred_fallthru
          _
        // Predicated region
        $region41: #{tpu_custom_call.1} parent=27 // pred_check
          %p852 = pneg %p135
        $region42: #{tpu_custom_call.1} parent=27 // pred_check_branch
          %854 = sbr.rel (%p852) target = $region44
        $region43: #{tpu_custom_call.1} parent=27 // pred_region
          %s855 = smul.u32 9, %s26
        $region44: #{tpu_custom_call.1} parent=27 // pred_fallthru
          _
      $region28: #{tpu_custom_call.1} parent=5 // pred_fallthru
        _
      %p856 = scmp.le.s32.totalorder 2, %s16
      // Predicated region
      $region45: #{tpu_custom_call.1} parent=5 // pred_check
        %p857 = pneg %p856
      $region46: #{tpu_custom_call.1} parent=5 // pred_check_branch
        %859 = sbr.rel (%p857) target = $region48
      $region47: #{tpu_custom_call.1} parent=5 // pred_region
        %s860 = ssub.s32 %s16, 2
        // Predicated region
        $region49: #{tpu_custom_call.1} parent=47 // pred_check
          %p861 = pneg %p113
        $region50: #{tpu_custom_call.1} parent=47 // pred_check_branch
          %863 = sbr.rel (%p861) target = $region52
        $region51: #{tpu_custom_call.1} parent=47 // pred_region
          %s864 = smul.u32 9, %s28
          %p865 = scmp.lt.s32.totalorder %s27, 1
          %s866 = scalar_select %p865, %s27, 1
          %p867 = scmp.lt.s32.totalorder %s864, 8
          %s868 = scalar_select %p867, %s864, 8
          %s869 = smul.addr %s866, 9
          %s870 = sadd.s32 %s868, %s869
          %s871 = smul.addr %s870, 8
          %s872 = scalar_lea.vmem %s2, %s871
        $region52: #{tpu_custom_call.1} parent=47 // pred_fallthru
          _
        // Predicated region
        $region53: #{tpu_custom_call.1} parent=47 // pred_check
          %p873 = pneg %p141
        $region54: #{tpu_custom_call.1} parent=47 // pred_check_branch
          %875 = sbr.rel (%p873) target = $region56
        $region55: #{tpu_custom_call.1} parent=47 // pred_region
          %s876 = smul.u32 9, %s28
          %p877 = scmp.lt.s32.totalorder %s27, 1
          %s878 = scalar_select %p877, %s27, 1
          %p879 = scmp.lt.s32.totalorder %s876, 8
          %s880 = scalar_select %p879, %s876, 8
          %s881 = smul.addr %s878, 9
          %s882 = sadd.s32 %s880, %s881
          %s883 = smul.addr %s882, 8
          %s884 = scalar_lea.vmem %s3, %s883
        $region56: #{tpu_custom_call.1} parent=47 // pred_fallthru
          _
      $region48: #{tpu_custom_call.1} parent=5 // pred_fallthru
        _
    $region6: #{tpu_custom_call.1} parent=1 // loop_footer
      %s20 = sadd.s32 1, %s16
    $region7: #{tpu_custom_call.1} parent=1 // loop_footer_branch
      %15 = sbr.rel target = $region3
    $region8: #{tpu_custom_call.1} parent=1 // loop_exit
      _
    %885 = vsyncpa [#allocation3], 1
    %s886 = scalar_lea.sflag [#allocation3], 1
    %887 = vsyncpa %s886, 1
    %888 = vsyncpa [#allocation5], 1
    %s889 = scalar_lea.sflag [#allocation5], 1
    %890 = vsyncpa %s889, 1

</llo_original>
